<compile_context>
chip_gen: v6e
topology: v6e:2x2x1
jax: 0.10.0
libtpu: 0.0.40
codegen_flags: <defaults>
</compile_context>

<pallas_src>
import jax
import jax.numpy as jnp
from jax.experimental import pallas as pl
from jax.experimental.pallas import tpu as pltpu


def _ffn_kernel(x_ref, w1_ref, b1_ref, w2_ref, b2_ref, o_ref, acc_ref):
    """Grid step (i, k): acc[i] += relu(x[i] @ w1[:, k-slab] + b1[k-slab]) @ w2[k-slab, :]."""
    k = pl.program_id(1)

    @pl.when(k == 0)
    def _init():
        # Seed the accumulator with the output bias -> no zero-fill, no finalize add.
        acc_ref[...] = jnp.broadcast_to(b2_ref[...], acc_ref.shape)

    # Cast activations to the weight compute dtype on-chip (cheap VPU op hidden
    # under the MXU); all accumulation / bias / ReLU stay in f32.
    xt = x_ref[...].astype(w1_ref.dtype)
    h = jnp.dot(xt, w1_ref[...], preferred_element_type=jnp.float32)      # (TM, TH)
    h = jnp.maximum(h + b1_ref[...], 0.0)
    acc_ref[...] += jnp.dot(h.astype(w2_ref.dtype), w2_ref[...],          # (TM, C)
                            preferred_element_type=jnp.float32)

    @pl.when(k == pl.num_programs(1) - 1)
    def _finalize():
        o_ref[...] = acc_ref[...].astype(o_ref.dtype)
    # TODO(synk): training-mode dropout (pltpu.prng_seed + pltpu.prng_random_bits
    # keyed on program_id(0)) not applied; with p=0 / eval() dropout is identity.


def _round_up(n, m):
    return ((n + m - 1) // m) * m


def _vmem_estimate(tm, th, c, x_bytes, w_bytes, out_bytes):
    """Rough per-step VMEM footprint (double-buffered operands + scratch + intermediates)."""
    return (2 * tm * c * x_bytes                 # x tile (double-buffered)
            + 2 * c * th * w_bytes               # w1 slab
            + 2 * th * c * w_bytes               # w2 slab
            + 2 * th * 4 + 2 * c * 4             # b1 slab, b2
            + 2 * tm * c * out_bytes             # output tile
            + tm * c * 4                         # f32 accumulator scratch
            + tm * th * 4 + tm * th * w_bytes)   # f32 intermediate h + its bf16 copy


def feed_forward(x, w1, b1, w2, b2, *, tm_target=1024, th_target=1024, out_dtype=None):
    """out = relu(x @ w1 + b1) @ w2 + b2.  x: (B, T, C) -> (B, T, C).

    Weights are used in their stored dtype (cast them to bf16 once at init, not
    per call); biases are applied in f32.
    """
    B, T, C = x.shape
    Cw, H = w1.shape
    assert Cw == C and w2.shape == (H, C)
    M = B * T
    out_dtype = out_dtype or x.dtype

    x_bytes = jnp.dtype(x.dtype).itemsize
    w_bytes = jnp.dtype(w1.dtype).itemsize
    out_bytes = jnp.dtype(out_dtype).itemsize

    # ---- tile selection: TM multiple of 8 (sublane), TH multiple of 128 (lane/MXU edge).
    tm = min(tm_target, _round_up(M, 8))
    th = min(th_target, _round_up(H, 128))

    # Budget the working set against this chip's VMEM (v7x: only 64 MiB / TC).
    try:
        vmem_cap = int(pltpu.get_tpu_info().vmem_capacity_bytes)
    except Exception:  # noqa: BLE001 - conservative fallback safe on all generations
        vmem_cap = 64 << 20
    budget = int(vmem_cap * 0.75)
    while _vmem_estimate(tm, th, C, x_bytes, w_bytes, out_bytes) > budget:
        if tm >= th and tm > 256:
            tm //= 2
        elif th > 256:
            th //= 2
        else:
            break

    # Pad M / H up to the tile size (exact: padded x rows are sliced off, padded
    # hidden columns/rows are zero so relu(0)=0 contributes nothing).
    M_pad = _round_up(M, tm)
    H_pad = _round_up(H, th)
    grid = (M_pad // tm, H_pad // th)

    x2d = x.reshape(M, C)
    if M_pad != M:
        x2d = jnp.pad(x2d, ((0, M_pad - M), (0, 0)))
    b1f = b1.reshape(1, H).astype(jnp.float32)
    b2f = b2.reshape(1, C).astype(jnp.float32)
    if H_pad != H:
        w1 = jnp.pad(w1, ((0, 0), (0, H_pad - H)))
        w2 = jnp.pad(w2, ((0, H_pad - H), (0, 0)))
        b1f = jnp.pad(b1f, ((0, 0), (0, H_pad - H)))

    vmem_limit = int(min(
        max(int(_vmem_estimate(tm, th, C, x_bytes, w_bytes, out_bytes) * 1.25), 32 << 20),
        int(vmem_cap * 0.9)))

    # Bytes include weight re-streaming: w1/w2/b1 are fetched once per M tile.
    n_m_tiles = grid[0]
    cost = pl.CostEstimate(
        flops=4 * M_pad * C * H_pad,
        transcendentals=0,
        bytes_accessed=int(M_pad * C * x_bytes
                           + n_m_tiles * (2 * C * H_pad * w_bytes + H_pad * 4)
                           + C * 4
                           + M_pad * C * out_bytes),
    )

    out2d = pl.pallas_call(
        _ffn_kernel,
        out_shape=jax.ShapeDtypeStruct((M_pad, C), out_dtype),
        grid_spec=pltpu.PrefetchScalarGridSpec(
            num_scalar_prefetch=0,
            grid=grid,
            in_specs=[
                pl.BlockSpec((tm, C), lambda i, k: (i, 0)),   # x tile (resident over k)
                pl.BlockSpec((C, th), lambda i, k: (0, k)),   # w1 H-slab
                pl.BlockSpec((1, th), lambda i, k: (0, k)),   # b1 H-slab
                pl.BlockSpec((th, C), lambda i, k: (k, 0)),   # w2 H-slab
                pl.BlockSpec((1, C), lambda i, k: (0, 0)),    # b2 (grid-invariant)
            ],
            out_specs=pl.BlockSpec((tm, C), lambda i, k: (i, 0)),
            scratch_shapes=[pltpu.VMEM((tm, C), jnp.float32)],  # f32 accumulator
        ),
        compiler_params=pltpu.CompilerParams(
            dimension_semantics=("parallel", "arbitrary"),
            vmem_limit_bytes=vmem_limit),
        cost_estimate=cost,
    )(x2d, w1, b1f, w2, b2f)

    if M_pad != M:
        out2d = out2d[:M]
    return out2d.reshape(B, T, C)


def init_params(key, n_embd, compute_dtype=jnp.bfloat16):
    """torch.nn.Linear-style init (uniform +-1/sqrt(fan_in)); weights stored in bf16 once."""
    hidden = 4 * n_embd
    k1, k2, k3, k4 = jax.random.split(key, 4)
    lim1 = 1.0 / jnp.sqrt(n_embd)
    lim2 = 1.0 / jnp.sqrt(hidden)
    w1 = jax.random.uniform(k1, (n_embd, hidden), jnp.float32, -lim1, lim1).astype(compute_dtype)
    b1 = jax.random.uniform(k2, (hidden,), jnp.float32, -lim1, lim1)
    w2 = jax.random.uniform(k3, (hidden, n_embd), jnp.float32, -lim2, lim2).astype(compute_dtype)
    b2 = jax.random.uniform(k4, (n_embd,), jnp.float32, -lim2, lim2)
    return w1, b1, w2, b2


if __name__ == "__main__":
    key = jax.random.PRNGKey(0)
    B, T, n_embd = 2, 8, 32          # hidden = 4*n_embd = 128 (toy, correctness-only shapes)
    dropout = 0.0                    # eval()/p=0 semantics -> dropout is identity

    kx, kp = jax.random.split(key)
    x = jax.random.normal(kx, (B, T, n_embd), jnp.float32)
    w1, b1, w2, b2 = init_params(kp, n_embd)

    out = feed_forward(x, w1, b1, w2, b2)
    jax.block_until_ready(out)

    # Reference with the same mixed precision (bf16 MXU operands; f32 acc/bias/ReLU).
    x2d = x.reshape(-1, n_embd)
    h = jnp.dot(x2d.astype(jnp.bfloat16), w1, preferred_element_type=jnp.float32) + b1
    h = jnp.maximum(h, 0.0)
    ref = (jnp.dot(h.astype(jnp.bfloat16), w2, preferred_element_type=jnp.float32)
           + b2).reshape(B, T, n_embd)

    assert out.shape == ref.shape and out.dtype == x.dtype
    assert jnp.allclose(out, ref, atol=2e-2, rtol=2e-2), "mismatch vs reference"

    print("KERNEL_OK")
</pallas_src>

<mosaic_0001>
module attributes {stable_mosaic.version = 11 : i64} {
  func.func @_ffn_kernel(%arg0: i32, %arg1: i32, %arg2: memref<16x32xf32, #tpu.memory_space<vmem>>, %arg3: memref<32x128xbf16, #tpu.memory_space<vmem>>, %arg4: memref<1x128xf32, #tpu.memory_space<vmem>>, %arg5: memref<128x32xbf16, #tpu.memory_space<vmem>>, %arg6: memref<1x32xf32, #tpu.memory_space<vmem>>, %arg7: memref<16x32xf32, #tpu.memory_space<vmem>>, %arg8: memref<16x32xf32, #tpu.memory_space<vmem>>) attributes {dimension_semantics = [#tpu.dimension_semantics<parallel>, #tpu.dimension_semantics<arbitrary>], iteration_bounds = array<i64: 1, 1>, scalar_prefetch = 0 : i64, scratch_operands = 1 : i64, tpu.core_type = #tpu.core_type<tc>, window_params = [{transform_indices = @transform_0, window_bounds = array<i64: 16, 32>}, {transform_indices = @transform_1, window_bounds = array<i64: 32, 128>}, {transform_indices = @transform_2, window_bounds = array<i64: 1, 128>}, {transform_indices = @transform_3, window_bounds = array<i64: 128, 32>}, {pipeline_mode = #tpu.pipeline_mode<synchronous>, transform_indices = @transform_4, window_bounds = array<i64: 1, 32>}, {transform_indices = @transform_5, window_bounds = array<i64: 16, 32>}]} {
    %c0_i32 = arith.constant 0 : i32
    %0 = arith.cmpi eq, %arg1, %c0_i32 : i32
    %1 = arith.extui %0 : i1 to i32
    %c0_i32_0 = arith.constant 0 : i32
    %2 = arith.cmpi ne, %1, %c0_i32_0 : i32
    scf.if %2 {
      %c0_16 = arith.constant 0 : index
      %c0_17 = arith.constant 0 : index
      %21 = vector.load %arg6[%c0_16, %c0_17] : memref<1x32xf32, #tpu.memory_space<vmem>>, vector<1x32xf32>
      %22 = vector.shape_cast %21 : vector<1x32xf32> to vector<1x32xf32>
      %23 = vector.broadcast %22 : vector<1x32xf32> to vector<16x32xf32>
      %c0_18 = arith.constant 0 : index
      %c0_19 = arith.constant 0 : index
      %24 = vector.load %arg8[%c0_18, %c0_19] : memref<16x32xf32, #tpu.memory_space<vmem>>, vector<16x32xf32>
      tpu.vector_store %arg8[%c0_18, %c0_19], %23 {strides = array<i32>} : memref<16x32xf32, #tpu.memory_space<vmem>>, vector<16x32xf32>,
    } else {
    }
    %c0 = arith.constant 0 : index
    %c0_1 = arith.constant 0 : index
    %3 = vector.load %arg2[%c0, %c0_1] : memref<16x32xf32, #tpu.memory_space<vmem>>, vector<16x32xf32>
    %4 = arith.truncf %3 : vector<16x32xf32> to vector<16x32xbf16>
    %c0_2 = arith.constant 0 : index
    %c0_3 = arith.constant 0 : index
    %5 = vector.load %arg3[%c0_2, %c0_3] : memref<32x128xbf16, #tpu.memory_space<vmem>>, vector<32x128xbf16>
    %cst = arith.constant dense<0.000000e+00> : vector<16x128xf32>
    %6 = tpu.matmul %4, %5, %cst {dimension_numbers = #tpu.dot_dimension_numbers<[1], [0], [0], [1], [0, 0, 1, 1], [], []>} : vector<16x32xbf16>, vector<32x128xbf16>, vector<16x128xf32> -> vector<16x128xf32>
    %c0_4 = arith.constant 0 : index
    %c0_5 = arith.constant 0 : index
    %7 = vector.load %arg4[%c0_4, %c0_5] : memref<1x128xf32, #tpu.memory_space<vmem>>, vector<1x128xf32>
    %8 = vector.broadcast %7 : vector<1x128xf32> to vector<16x128xf32>
    %9 = arith.addf %6, %8 : vector<16x128xf32>
    %cst_6 = arith.constant 0.000000e+00 : f32
    %10 = vector.broadcast %cst_6 : f32 to vector<16x128xf32>
    %11 = arith.maximumf %9, %10 : vector<16x128xf32>
    %c0_7 = arith.constant 0 : index
    %c0_8 = arith.constant 0 : index
    %12 = vector.load %arg8[%c0_7, %c0_8] : memref<16x32xf32, #tpu.memory_space<vmem>>, vector<16x32xf32>
    %13 = arith.truncf %11 : vector<16x128xf32> to vector<16x128xbf16>
    %c0_9 = arith.constant 0 : index
    %c0_10 = arith.constant 0 : index
    %14 = vector.load %arg5[%c0_9, %c0_10] : memref<128x32xbf16, #tpu.memory_space<vmem>>, vector<128x32xbf16>
    %cst_11 = arith.constant dense<0.000000e+00> : vector<16x32xf32>
    %15 = tpu.matmul %13, %14, %cst_11 {dimension_numbers = #tpu.dot_dimension_numbers<[1], [0], [0], [1], [0, 0, 1, 1], [], []>} : vector<16x128xbf16>, vector<128x32xbf16>, vector<16x32xf32> -> vector<16x32xf32>
    %16 = arith.addf %12, %15 : vector<16x32xf32>
    %c0_12 = arith.constant 0 : index
    %c0_13 = arith.constant 0 : index
    %17 = vector.load %arg8[%c0_12, %c0_13] : memref<16x32xf32, #tpu.memory_space<vmem>>, vector<16x32xf32>
    tpu.vector_store %arg8[%c0_12, %c0_13], %16 {strides = array<i32>} : memref<16x32xf32, #tpu.memory_space<vmem>>, vector<16x32xf32>,
    %c0_i32_14 = arith.constant 0 : i32
    %18 = arith.cmpi eq, %arg1, %c0_i32_14 : i32
    %19 = arith.extui %18 : i1 to i32
    %c0_i32_15 = arith.constant 0 : i32
    %20 = arith.cmpi ne, %19, %c0_i32_15 : i32
    scf.if %20 {
      %c0_16 = arith.constant 0 : index
      %c0_17 = arith.constant 0 : index
      %21 = vector.load %arg8[%c0_16, %c0_17] : memref<16x32xf32, #tpu.memory_space<vmem>>, vector<16x32xf32>
      %c0_18 = arith.constant 0 : index
      %c0_19 = arith.constant 0 : index
      %22 = vector.load %arg7[%c0_18, %c0_19] : memref<16x32xf32, #tpu.memory_space<vmem>>, vector<16x32xf32>
      tpu.vector_store %arg7[%c0_18, %c0_19], %21 {strides = array<i32>} : memref<16x32xf32, #tpu.memory_space<vmem>>, vector<16x32xf32>,
    } else {
    }
    return
  }
  func.func @transform_0(%arg0: i32, %arg1: i32) -> (i32, i32) {
    %c0_i32 = arith.constant 0 : i32
    %c0_i32_0 = arith.constant 0 : i32
    return %arg0, %c0_i32 : i32, i32
  }
  func.func @transform_1(%arg0: i32, %arg1: i32) -> (i32, i32) {
    %c0_i32 = arith.constant 0 : i32
    %c0_i32_0 = arith.constant 0 : i32
    return %c0_i32, %arg1 : i32, i32
  }
  func.func @transform_2(%arg0: i32, %arg1: i32) -> (i32, i32) {
    %c0_i32 = arith.constant 0 : i32
    %c0_i32_0 = arith.constant 0 : i32
    return %c0_i32, %arg1 : i32, i32
  }
  func.func @transform_3(%arg0: i32, %arg1: i32) -> (i32, i32) {
    %c0_i32 = arith.constant 0 : i32
    %c0_i32_0 = arith.constant 0 : i32
    return %arg1, %c0_i32 : i32, i32
  }
  func.func @transform_4(%arg0: i32, %arg1: i32) -> (i32, i32) {
    %c0_i32 = arith.constant 0 : i32
    %c0_i32_0 = arith.constant 0 : i32
    %c0_i32_1 = arith.constant 0 : i32
    return %c0_i32, %c0_i32_0 : i32, i32
  }
  func.func @transform_5(%arg0: i32, %arg1: i32) -> (i32, i32) {
    %c0_i32 = arith.constant 0 : i32
    %c0_i32_0 = arith.constant 0 : i32
    return %arg0, %c0_i32 : i32, i32
  }
}

</mosaic_0001>

<llo_original>
// kernel: tpu_custom_call.1
$region0: #{tpu_custom_call.1}
  #allocation0 [shape = 'u32[]', space=smem, size = 0x4, offset = 0x4, fixed_abs, tag = 'smem constant byte address 0x4 - core index']
  #allocation1 [shape = 'u32[144,128]{1,0:T(1,128)}', space=vmem, size = 0x12000, scoped, tag = 'internal scratch']
  #allocation2 [shape = 'f32[16,32]{1,0:T(8,128)}', space=vmem, size = 0x2000, scoped, tag = 'scratch operand']
  %s0 = inlined_call_operand.vmem [shape: f32[16,32], index: 0, kind: input, shape index: {}]
  %s1 = inlined_call_operand.vmem [shape: bf16[32,128], index: 1, kind: input, shape index: {}]
  %s2 = inlined_call_operand.vmem [shape: f32[1,128], index: 2, kind: input, shape index: {}]
  %s3 = inlined_call_operand.vmem [shape: bf16[128,32], index: 3, kind: input, shape index: {}]
  %s4 = inlined_call_operand.vmem [shape: f32[1,32], index: 4, kind: input, shape index: {}]
  %s5 = inlined_call_operand.hbm [shape: f32[16,32], index: 5, kind: output, shape index: {}]
  %s6 = sld [smem:[#allocation0]]
  $region38: #{tpu_custom_call.1} parent=0
    _
  %s8 = ssub.s32 1, %s6
  %s9 = scalar_select 0, %s8, %s6
  $region1: #{tpu_custom_call.1} parent=0
    #allocation3 [shape = 'u8[8192]{0}', space=vmem, size = 0x2000, scoped, tag = 'output window, operand 0, single buffered']
    #allocation4 [shape = 's32[1]{0}', space=sflag, size = 0x4, scoped, tag = 'scoped memory for tpu_custom_call.1']
    %10 = vsyncpa [#allocation4], 0
    // Predicated region
    $region2: #{tpu_custom_call.1} parent=1 // pred_check
      _
    $region3: #{tpu_custom_call.1} parent=1 // pred_check_branch
      %12 = sbr.rel (0) target = $region5
    $region4: #{tpu_custom_call.1} parent=1 // pred_region
      _
    $region5: #{tpu_custom_call.1} parent=1 // pred_fallthru
      _
    // Predicated region
    $region6: #{tpu_custom_call.1} parent=1 // pred_check
      _
    $region7: #{tpu_custom_call.1} parent=1 // pred_check_branch
      %14 = sbr.rel (0) target = $region9
    $region8: #{tpu_custom_call.1} parent=1 // pred_region
      _
    $region9: #{tpu_custom_call.1} parent=1 // pred_fallthru
      _
    // Predicated region
    $region10: #{tpu_custom_call.1} parent=1 // pred_check
      _
    $region11: #{tpu_custom_call.1} parent=1 // pred_check_branch
      %16 = sbr.rel (0) target = $region13
    $region12: #{tpu_custom_call.1} parent=1 // pred_region
      _
    $region13: #{tpu_custom_call.1} parent=1 // pred_fallthru
      _
    // Predicated region
    $region14: #{tpu_custom_call.1} parent=1 // pred_check
      _
    $region15: #{tpu_custom_call.1} parent=1 // pred_check_branch
      %18 = sbr.rel (0) target = $region17
    $region16: #{tpu_custom_call.1} parent=1 // pred_region
      _
    $region17: #{tpu_custom_call.1} parent=1 // pred_fallthru
      _
    // Predicated region
    $region18: #{tpu_custom_call.1} parent=1 // pred_check
      _
    $region19: #{tpu_custom_call.1} parent=1 // pred_check_branch
      %20 = sbr.rel (0) target = $region21
    $region20: #{tpu_custom_call.1} parent=1 // pred_region
      _
    $region21: #{tpu_custom_call.1} parent=1 // pred_fallthru
      _
    %p22 = scmp.eq.s32.totalorder 0, 0
    // Predicated region
    $region22: #{tpu_custom_call.1} parent=1 // pred_check
      %p23 = pneg %p22
    $region23: #{tpu_custom_call.1} parent=1 // pred_check_branch
      %25 = sbr.rel (%p23) target = $region25
    $region24: #{tpu_custom_call.1} parent=1 // pred_region
      %v26 = vld [vmem:[%s4] sm:$0x1]
      %v28 = vlaneseq
      %v29 = vshrl.u32 %v28, 7
      %v30 = vsub.s32 0, %v29
      %v31 = vrot.slane %v26, %v30
      %vm33 = vcmask 261120
      %34 = vst.msk [vmem:[#allocation2] sm:$0xff] %vm33, %v31
      %35 = vst.msk [vmem:[#allocation2 + $0x8] sm:$0xff] %vm33, %v31
    $region25: #{tpu_custom_call.1} parent=1 // pred_fallthru
      _
    %v36 = vld [vmem:[%s0] sm:$0xff]
    %v37 = vld [vmem:[%s0 + $0x8] sm:$0xff]
    %v38 = vpack.c.bf16 %v37, %v36
    %v39 = vld [vmem:[%s1] sm:$0xf]
    %v40 = vld [vmem:[%s1 + $0x4] sm:$0xf]
    %v41 = vld [vmem:[%s1 + $0x8] sm:$0xf]
    %v42 = vld [vmem:[%s1 + $0xc] sm:$0xf]
    %v43 = vld [vmem:[%s2] sm:$0x1]
    %v45 = vlaneseq
    %v46 = vshrl.u32 %v45, 7
    %v47 = vsub.s32 0, %v46
    %v48 = vrot.slane %v43, %v47
    %v54 = vunpack.c.l.b16 %v39
    %v55 = vunpack.c.l.b16 %v40
    %v56 = vunpack.c.l.b16 %v41
    %v57 = vunpack.c.l.b16 %v42
    %v58 = vpack.c.b16 %v55, %v54
    %v59 = vpack.c.b16 %v57, %v56
    %vm62 = vcmask 261120
    %v64 = vsel %vm62, %v38, 0
    %66 = vmatprep.subr.bf16.mxu0 0
    %67 = vmatpush1.bf16.msra.mxu0 0
    %68 = vmatprep.subr.bf16.mxu0 0
    %69 = vmatpush1.bf16.msra.mxu0 0
    %70 = vmatprep.subr.bf16.mxu0 0
    %71 = vmatpush1.bf16.msra.mxu0 0
    %72 = vmatprep.subr.bf16.mxu0 0
    %73 = vmatpush1.bf16.msra.mxu0 0
    %74 = vmatprep.subr.bf16.mxu0 0
    %75 = vmatpush1.bf16.msra.mxu0 0
    %76 = vmatprep.subr.bf16.mxu0 0
    %77 = vmatpush1.bf16.msra.mxu0 0
    %78 = vmatprep.subr.bf16.mxu0 0
    %79 = vmatpush1.bf16.msra.mxu0 %v59
    %80 = vmatprep.subr.bf16.mxu0 0
    %81 = vmatpush1.bf16.msra.mxu0 %v58
    %82 = vmatprep.subr.bf16.mxu0 0
    %83 = vmatpush2.bf16.msra.mxu0 0
    %84 = vmatprep.subr.bf16.mxu0 0
    %85 = vmatpush2.bf16.msra.mxu0 0
    %86 = vmatprep.subr.bf16.mxu0 0
    %87 = vmatpush2.bf16.msra.mxu0 0
    %88 = vmatprep.subr.bf16.mxu0 0
    %89 = vmatpush2.bf16.msra.mxu0 0
    %90 = vmatprep.subr.bf16.mxu0 0
    %91 = vmatpush2.bf16.msra.mxu0 0
    %92 = vmatprep.subr.bf16.mxu0 0
    %93 = vmatpush2.bf16.msra.mxu0 0
    %94 = vmatprep.subr.bf16.mxu0 0
    %95 = vmatpush2.bf16.msra.mxu0 0
    %96 = vmatprep.subr.bf16.mxu0 0
    %97 = vmatpush2.bf16.msra.mxu0 0
    %98 = vmatprep.mubr.bf16.mxu0 0
    %99 = vmatmul.mubr.bf16.gmra.mxu0 %v64
    %v100 = vpop.f32.mrf.mxu0
    %v101 = vadd.f32 %v48, %v100
    %v102 = vpop.f32.mrf.mxu0
    %v103 = vpop.f32.mrf.mxu0
    %v104 = vadd.f32 %v48, %v103
    %v105 = vpop.f32.mrf.mxu0
    %106 = vdwg.mxu0
    %v107 = vmax.f32 %v101, 0.0
    %v108 = vmax.f32 %v104, 0.0
    %v109 = vld [vmem:[#allocation2] sm:$0xff]
    %v110 = vld [vmem:[#allocation2 + $0x8] sm:$0xff]
    %v111 = vpack.c.bf16 %v108, %v107
    %v112 = vld [vmem:[%s3] sm:$0xf]
    %v113 = vld [vmem:[%s3 + $0x4] sm:$0xf]
    %v114 = vld [vmem:[%s3 + $0x8] sm:$0xf]
    %v115 = vld [vmem:[%s3 + $0xc] sm:$0xf]
    %v116 = vld [vmem:[%s3 + $0x10] sm:$0xf]
    %v117 = vld [vmem:[%s3 + $0x14] sm:$0xf]
    %v118 = vld [vmem:[%s3 + $0x18] sm:$0xf]
    %v119 = vld [vmem:[%s3 + $0x1c] sm:$0xf]
    %v120 = vld [vmem:[%s3 + $0x20] sm:$0xf]
    %v121 = vld [vmem:[%s3 + $0x24] sm:$0xf]
    %v122 = vld [vmem:[%s3 + $0x28] sm:$0xf]
    %v123 = vld [vmem:[%s3 + $0x2c] sm:$0xf]
    %v124 = vld [vmem:[%s3 + $0x30] sm:$0xf]
    %v125 = vld [vmem:[%s3 + $0x34] sm:$0xf]
    %v126 = vld [vmem:[%s3 + $0x38] sm:$0xf]
    %v127 = vld [vmem:[%s3 + $0x3c] sm:$0xf]
    %v144 = vunpack.c.l.b16 %v112
    %v145 = vunpack.c.l.b16 %v113
    %v146 = vunpack.c.l.b16 %v114
    %v147 = vunpack.c.l.b16 %v115
    %v148 = vunpack.c.l.b16 %v116
    %v149 = vunpack.c.l.b16 %v117
    %v150 = vunpack.c.l.b16 %v118
    %v151 = vunpack.c.l.b16 %v119
    %v152 = vunpack.c.l.b16 %v120
    %v153 = vunpack.c.l.b16 %v121
    %v154 = vunpack.c.l.b16 %v122
    %v155 = vunpack.c.l.b16 %v123
    %v156 = vunpack.c.l.b16 %v124
    %v157 = vunpack.c.l.b16 %v125
    %v158 = vunpack.c.l.b16 %v126
    %v159 = vunpack.c.l.b16 %v127
    %v160 = vpack.c.b16 %v145, %v144
    %v161 = vpack.c.b16 %v147, %v146
    %v162 = vpack.c.b16 %v149, %v148
    %v163 = vpack.c.b16 %v151, %v150
    %v164 = vpack.c.b16 %v153, %v152
    %v165 = vpack.c.b16 %v155, %v154
    %v166 = vpack.c.b16 %v157, %v156
    %v167 = vpack.c.b16 %v159, %v158
    %176 = vmatprep.subr.bf16.mxu0 0
    %177 = vmatpush1.bf16.msra.mxu0 %v167
    %178 = vmatprep.subr.bf16.mxu0 0
    %179 = vmatpush1.bf16.msra.mxu0 %v166
    %180 = vmatprep.subr.bf16.mxu0 0
    %181 = vmatpush1.bf16.msra.mxu0 %v165
    %182 = vmatprep.subr.bf16.mxu0 0
    %183 = vmatpush1.bf16.msra.mxu0 %v164
    %184 = vmatprep.subr.bf16.mxu0 0
    %185 = vmatpush1.bf16.msra.mxu0 %v163
    %186 = vmatprep.subr.bf16.mxu0 0
    %187 = vmatpush1.bf16.msra.mxu0 %v162
    %188 = vmatprep.subr.bf16.mxu0 0
    %189 = vmatpush1.bf16.msra.mxu0 %v161
    %190 = vmatprep.subr.bf16.mxu0 0
    %191 = vmatpush1.bf16.msra.mxu0 %v160
    %192 = vmatprep.subr.bf16.mxu0 0
    %193 = vmatpush2.bf16.msra.mxu0 0
    %194 = vmatprep.subr.bf16.mxu0 0
    %195 = vmatpush2.bf16.msra.mxu0 0
    %196 = vmatprep.subr.bf16.mxu0 0
    %197 = vmatpush2.bf16.msra.mxu0 0
    %198 = vmatprep.subr.bf16.mxu0 0
    %199 = vmatpush2.bf16.msra.mxu0 0
    %200 = vmatprep.subr.bf16.mxu0 0
    %201 = vmatpush2.bf16.msra.mxu0 0
    %202 = vmatprep.subr.bf16.mxu0 0
    %203 = vmatpush2.bf16.msra.mxu0 0
    %204 = vmatprep.subr.bf16.mxu0 0
    %205 = vmatpush2.bf16.msra.mxu0 0
    %206 = vmatprep.subr.bf16.mxu0 0
    %207 = vmatpush2.bf16.msra.mxu0 0
    %208 = vmatprep.mubr.bf16.mxu0 0
    %209 = vmatmul.mubr.bf16.gmra.mxu0 %v111
    %v210 = vpop.f32.mrf.mxu0
    %v211 = vadd.f32 0.0, %v210
    %v212 = vpop.f32.mrf.mxu0
    %v213 = vpop.f32.mrf.mxu0
    %v214 = vadd.f32 0.0, %v213
    %v215 = vpop.f32.mrf.mxu0
    %216 = vdwg.mxu0
    %v217 = vadd.f32 %v109, %v211
    %v218 = vadd.f32 %v110, %v214
    %219 = vst.msk [vmem:[#allocation2] sm:$0xff] %vm62, %v217
    %220 = vst.msk [vmem:[#allocation2 + $0x8] sm:$0xff] %vm62, %v218
    // Predicated region
    $region26: #{tpu_custom_call.1} parent=1 // pred_check
      %p221 = pneg %p22
    $region27: #{tpu_custom_call.1} parent=1 // pred_check_branch
      %223 = sbr.rel (%p221) target = $region29
    $region28: #{tpu_custom_call.1} parent=1 // pred_region
      %v224 = vld [vmem:[#allocation2] sm:$0xff]
      %v225 = vld [vmem:[#allocation2 + $0x8] sm:$0xff]
      %226 = vst.msk [vmem:[#allocation3] sm:$0xff] %vm62, %v224
      %227 = vst.msk [vmem:[#allocation3 + $0x8] sm:$0xff] %vm62, %v225
    $region29: #{tpu_custom_call.1} parent=1 // pred_fallthru
      _
    // Predicated region
    $region30: #{tpu_custom_call.1} parent=1 // pred_check
      _
    $region31: #{tpu_custom_call.1} parent=1 // pred_check_branch
      %229 = sbr.rel (0) target = $region33
    $region32: #{tpu_custom_call.1} parent=1 // pred_region
      %s231 = ssub.s32 256, 256
      %232 = vsyncadd [#allocation4], %s231
      %s233 = sshll.u32 [#allocation3], 4
      %s234 = int_to_ptr.vmem [resolvable:$true] %s233
      %239 = dma.vmem_to_hbm [thread:$0]  %s234, 256, %s5, [#allocation4], 128, 128, 8
    $region33: #{tpu_custom_call.1} parent=1 // pred_fallthru
      _
    // Predicated region
    $region34: #{tpu_custom_call.1} parent=1 // pred_check
      _
    $region35: #{tpu_custom_call.1} parent=1 // pred_check_branch
      %241 = sbr.rel (0) target = $region37
    $region36: #{tpu_custom_call.1} parent=1 // pred_region
      %242 = dma.done [#allocation4], 256
    $region37: #{tpu_custom_call.1} parent=1 // pred_fallthru
      _
    %243 = vsyncpa [#allocation4], 1

</llo_original>
